<compile_context>
chip_gen: v6e
topology: v6e:2x2x1
jax: 0.10.0
libtpu: 0.0.40
codegen_flags: <defaults>
</compile_context>

<pallas_src>
import functools

import jax
import jax.numpy as jnp
from jax import lax
from jax.experimental import pallas as pl
from jax.experimental.pallas import tpu as pltpu

# opt.rpn_sigma / opt.roi_sigma (simple-faster-rcnn defaults)
RPN_SIGMA = 3.0
ROI_SIGMA = 1.0


def _smooth_l1_sum(diff, sigma):
    # diff already includes in_weight (zeros where masked)
    sigma2 = sigma * sigma
    abs_diff = jnp.abs(diff)
    y = jnp.where(abs_diff < (1.0 / sigma2),
                  (0.5 * sigma2) * diff * diff,
                  abs_diff - 0.5 / sigma2)
    return jnp.sum(y)


def _loss_kernel(rpn_ref, roi_ref, out_ref, *, n_class, n_sample):
    # ================= RPN (feature-major slab: (11, Na)) =================
    rpn = rpn_ref[...]                                  # (11, Na) f32
    gt_loc = rpn[0:4, :]                                # (4, Na)
    pr_loc = rpn[4:8, :]                                # (4, Na)
    s0 = rpn[8:9, :]                                    # (1, Na) score class 0
    s1 = rpn[9:10, :]                                   # (1, Na) score class 1
    label = rpn[10:11, :]                               # (1, Na) labels {-1,0,1} as f32

    valid = (label >= 0.0).astype(jnp.float32)          # (1, Na)
    pos = (label > 0.0).astype(jnp.float32)             # (1, Na)
    n_valid = jnp.sum(valid)                            # scalar, reused by both RPN losses

    # --- RPN localization (smooth L1) ---
    diff_rpn = pos * (pr_loc - gt_loc)                  # (1,Na) broadcast over 4 sublanes
    rpn_loc_loss = _smooth_l1_sum(diff_rpn, RPN_SIGMA) / n_valid

    # --- RPN classification (CE over 2 classes, ignore_index=-1), all elementwise ---
    m = jnp.maximum(s0, s1)
    lse = jnp.log(jnp.exp(s0 - m) + jnp.exp(s1 - m)) + m
    gathered = jnp.where(label == 0.0, s0, s1)          # ignored rows masked by `valid`
    rpn_cls_loss = jnp.sum((lse - gathered) * valid) / n_valid

    # ================= ROI (row-major slab: (Ns, 2*C4 + C + 1)) =================
    c4 = n_class * 4
    roi = roi_ref[...]                                  # (Ns, 2*c4 + C + 1) f32
    roi_cls_loc = roi[:, 0:c4]                          # (Ns, C*4)
    gt_tiled = roi[:, c4:2 * c4]                        # (Ns, C*4) — tiled in wrapper
    roi_score = roi[:, 2 * c4:2 * c4 + n_class]         # (Ns, C)
    roi_label = roi[:, 2 * c4 + n_class:2 * c4 + n_class + 1]  # (Ns, 1) f32

    # --- ROI localization: per-sample class gather via column-index mask ---
    col = lax.broadcasted_iota(jnp.int32, (n_sample, c4), 1)
    cls_idx = (col >> 2).astype(jnp.float32)            # column // 4 -> class id
    w = jnp.logical_and(cls_idx == roi_label, roi_label > 0.0).astype(jnp.float32)
    diff_roi = w * (roi_cls_loc - gt_tiled)
    n_valid_roi = jnp.sum((roi_label >= 0.0).astype(jnp.float32))
    roi_loc_loss = _smooth_l1_sum(diff_roi, ROI_SIGMA) / n_valid_roi

    # --- ROI classification (CE, mean over samples) ---
    m2 = jnp.max(roi_score, axis=-1, keepdims=True)
    lse2 = jnp.log(jnp.sum(jnp.exp(roi_score - m2), axis=-1, keepdims=True)) + m2
    cls_iota = lax.broadcasted_iota(jnp.int32, roi_score.shape, 1).astype(jnp.float32)
    onehot = (cls_iota == roi_label).astype(jnp.float32)
    gathered2 = jnp.sum(onehot * roi_score, axis=-1, keepdims=True)
    roi_cls_loss = jnp.sum(lse2 - gathered2) / float(n_sample)

    # ================= outputs =================
    out_ref[0] = rpn_loc_loss
    out_ref[1] = rpn_cls_loss
    out_ref[2] = roi_loc_loss
    out_ref[3] = roi_cls_loss
    out_ref[4] = rpn_loc_loss + rpn_cls_loss + roi_loc_loss + roi_cls_loss


def faster_rcnn_loss(gt_rpn_loc, gt_rpn_label, gt_roi_loc, gt_roi_label,
                     roi_cls_loc, roi_score, rpn_locs, rpn_scores):
    """Matches FasterRCNNLoss.forward: returns [rpn_loc, rpn_cls, roi_loc, roi_cls, total]."""
    rpn_loc = rpn_locs[0].astype(jnp.float32)               # (Na, 4)
    rpn_score = rpn_scores[0].astype(jnp.float32)           # (Na, 2)
    na = rpn_loc.shape[0]

    # ---- lane-dense / feature-major RPN slab: (11, Na), one contiguous DMA ----
    rpn_slab = jnp.concatenate([
        gt_rpn_loc.astype(jnp.float32).T,                   # (4, Na)
        rpn_loc.T,                                          # (4, Na)
        rpn_score.T,                                        # (2, Na)
        gt_rpn_label.astype(jnp.float32).reshape(1, na),    # (1, Na)
    ], axis=0)

    # ---- ROI slab: (Ns, 2*C*4 + C + 1), one contiguous DMA ----
    n_sample = roi_cls_loc.shape[0]
    n_class = roi_score.shape[1]
    roi_cls_loc_flat = roi_cls_loc.astype(jnp.float32).reshape(n_sample, n_class * 4)
    gt_roi_tiled = jnp.tile(gt_roi_loc.astype(jnp.float32), (1, n_class))   # (Ns, C*4)
    roi_slab = jnp.concatenate([
        roi_cls_loc_flat,                                   # (Ns, C*4)
        gt_roi_tiled,                                       # (Ns, C*4)
        roi_score.astype(jnp.float32),                      # (Ns, C)
        gt_roi_label.astype(jnp.float32).reshape(n_sample, 1),  # (Ns, 1)
    ], axis=1)

    out = pl.pallas_call(
        functools.partial(_loss_kernel, n_class=n_class, n_sample=n_sample),
        out_shape=jax.ShapeDtypeStruct((5,), jnp.float32),
        in_specs=[pl.BlockSpec(memory_space=pltpu.MemorySpace.VMEM),
                  pl.BlockSpec(memory_space=pltpu.MemorySpace.VMEM)],
        out_specs=pl.BlockSpec(memory_space=pltpu.MemorySpace.SMEM),
    )(rpn_slab, roi_slab)
    return [out[0], out[1], out[2], out[3], out[4]]


# ------------------------- pure-JAX reference -------------------------
def _ref_forward(gt_rpn_loc, gt_rpn_label, gt_roi_loc, gt_roi_label,
                 roi_cls_loc, roi_score, rpn_locs, rpn_scores):
    def smooth_l1(x, t, w, sigma):
        sigma2 = sigma ** 2
        diff = w * (x - t)
        ad = jnp.abs(diff)
        flag = (ad < 1.0 / sigma2).astype(jnp.float32)
        return jnp.sum(flag * (sigma2 / 2.0) * diff ** 2 + (1 - flag) * (ad - 0.5 / sigma2))

    def loc_loss(pred, gt, label, sigma):
        w = jnp.broadcast_to((label > 0).astype(jnp.float32)[:, None], gt.shape)
        return smooth_l1(pred, gt, w, sigma) / jnp.sum(label >= 0).astype(jnp.float32)

    def ce(scores, labels, ignore=None):
        logp = jax.nn.log_softmax(scores, axis=-1)
        safe = jnp.clip(labels, 0, scores.shape[-1] - 1)
        nll = -jnp.take_along_axis(logp, safe[:, None], axis=-1)[:, 0]
        if ignore is not None:
            v = (labels != ignore).astype(jnp.float32)
            return jnp.sum(nll * v) / jnp.sum(v)
        return jnp.mean(nll)

    rpn_loc = rpn_locs[0]
    rpn_score = rpn_scores[0]
    l1 = loc_loss(rpn_loc, gt_rpn_loc, gt_rpn_label, RPN_SIGMA)
    l2 = ce(rpn_score, gt_rpn_label, ignore=-1)
    n = roi_cls_loc.shape[0]
    rcl = roi_cls_loc.reshape(n, -1, 4)
    roi_loc = rcl[jnp.arange(n), gt_roi_label]
    l3 = loc_loss(roi_loc, gt_roi_loc, gt_roi_label, ROI_SIGMA)
    l4 = ce(roi_score, gt_roi_label)
    return [l1, l2, l3, l4, l1 + l2 + l3 + l4]


if __name__ == "__main__":
    key = jax.random.PRNGKey(0)
    ks = jax.random.split(key, 8)

    Na = 256      # number of anchors
    Ns = 32       # number of sampled RoIs
    C = 8         # number of classes (incl. background)

    gt_rpn_loc = jax.random.normal(ks[0], (Na, 4), jnp.float32)
    gt_rpn_label = jax.random.randint(ks[1], (Na,), -1, 2, jnp.int32)     # {-1,0,1}
    gt_roi_loc = jax.random.normal(ks[2], (Ns, 4), jnp.float32)
    gt_roi_label = jax.random.randint(ks[3], (Ns,), 0, C, jnp.int32)
    roi_cls_loc = jax.random.normal(ks[4], (Ns, C * 4), jnp.float32)
    roi_score = jax.random.normal(ks[5], (Ns, C), jnp.float32)
    rpn_locs = jax.random.normal(ks[6], (1, Na, 4), jnp.float32)
    rpn_scores = jax.random.normal(ks[7], (1, Na, 2), jnp.float32)

    losses = faster_rcnn_loss(gt_rpn_loc, gt_rpn_label, gt_roi_loc, gt_roi_label,
                              roi_cls_loc, roi_score, rpn_locs, rpn_scores)
    losses = [jax.block_until_ready(l) for l in losses]

    ref = _ref_forward(gt_rpn_loc, gt_rpn_label, gt_roi_loc, gt_roi_label,
                       roi_cls_loc, roi_score, rpn_locs, rpn_scores)
    for got, want in zip(losses, ref):
        assert jnp.allclose(got, want, rtol=1e-4, atol=1e-5), (got, want)

    print("KERNEL_OK")
</pallas_src>

<mosaic_0001>
module attributes {stable_mosaic.version = 11 : i64} {
  func.func @_loss_kernel(%arg0: memref<11x256xf32, #tpu.memory_space<vmem>>, %arg1: memref<32x73xf32, #tpu.memory_space<vmem>>, %arg2: memref<5xf32, #tpu.memory_space<smem>>) attributes {dimension_semantics = [], scalar_prefetch = 0 : i64, scratch_operands = 0 : i64, tpu.core_type = #tpu.core_type<tc>} {
    %c0 = arith.constant 0 : index
    %c0_0 = arith.constant 0 : index
    %0 = vector.load %arg0[%c0, %c0_0] : memref<11x256xf32, #tpu.memory_space<vmem>>, vector<11x256xf32>
    %1 = vector.extract_strided_slice %0 {offsets = [0, 0], sizes = [4, 256], strides = [1, 1]} : vector<11x256xf32> to vector<4x256xf32>
    %2 = vector.extract_strided_slice %0 {offsets = [4, 0], sizes = [4, 256], strides = [1, 1]} : vector<11x256xf32> to vector<4x256xf32>
    %3 = vector.extract_strided_slice %0 {offsets = [8, 0], sizes = [1, 256], strides = [1, 1]} : vector<11x256xf32> to vector<1x256xf32>
    %4 = vector.extract_strided_slice %0 {offsets = [9, 0], sizes = [1, 256], strides = [1, 1]} : vector<11x256xf32> to vector<1x256xf32>
    %5 = vector.extract_strided_slice %0 {offsets = [10, 0], sizes = [1, 256], strides = [1, 1]} : vector<11x256xf32> to vector<1x256xf32>
    %cst = arith.constant 0.000000e+00 : f32
    %6 = vector.broadcast %cst : f32 to vector<1x256xf32>
    %7 = arith.cmpf oge, %5, %6 : vector<1x256xf32>
    %8 = arith.extui %7 : vector<1x256xi1> to vector<1x256xi32>
    %9 = arith.sitofp %8 : vector<1x256xi32> to vector<1x256xf32>
    %cst_1 = arith.constant 0.000000e+00 : f32
    %10 = vector.broadcast %cst_1 : f32 to vector<1x256xf32>
    %11 = arith.cmpf ogt, %5, %10 : vector<1x256xf32>
    %12 = arith.extui %11 : vector<1x256xi1> to vector<1x256xi32>
    %13 = arith.sitofp %12 : vector<1x256xi32> to vector<1x256xf32>
    %14 = vector.shape_cast %9 : vector<1x256xf32> to vector<1x1x256xf32>
    %cst_2 = arith.constant dense<0.000000e+00> : vector<1xf32>
    %15 = vector.multi_reduction <add>, %14, %cst_2 [1, 2] : vector<1x1x256xf32> to vector<1xf32>
    %16 = vector.shape_cast %15 : vector<1xf32> to vector<1x1x1xf32>
    %17 = vector.extract %16[0, 0, 0] : f32 from vector<1x1x1xf32>
    %18 = arith.subf %2, %1 : vector<4x256xf32>
    %19 = vector.broadcast %13 : vector<1x256xf32> to vector<4x256xf32>
    %20 = arith.mulf %19, %18 : vector<4x256xf32>
    %21 = math.absf %20 : vector<4x256xf32>
    %cst_3 = arith.constant 0.111111112 : f32
    %22 = vector.broadcast %cst_3 : f32 to vector<4x256xf32>
    %23 = arith.cmpf olt, %21, %22 : vector<4x256xf32>
    %cst_4 = arith.constant 4.500000e+00 : f32
    %24 = vector.broadcast %cst_4 : f32 to vector<4x256xf32>
    %25 = arith.mulf %24, %20 : vector<4x256xf32>
    %26 = arith.mulf %25, %20 : vector<4x256xf32>
    %cst_5 = arith.constant 0.055555556 : f32
    %27 = vector.broadcast %cst_5 : f32 to vector<4x256xf32>
    %28 = arith.subf %21, %27 : vector<4x256xf32>
    %29 = arith.select %23, %26, %28 : vector<4x256xi1>, vector<4x256xf32>
    %30 = vector.shape_cast %29 : vector<4x256xf32> to vector<1x4x256xf32>
    %cst_6 = arith.constant dense<0.000000e+00> : vector<1xf32>
    %31 = vector.multi_reduction <add>, %30, %cst_6 [1, 2] : vector<1x4x256xf32> to vector<1xf32>
    %32 = vector.shape_cast %31 : vector<1xf32> to vector<1x1x1xf32>
    %33 = vector.extract %32[0, 0, 0] : f32 from vector<1x1x1xf32>
    %34 = arith.divf %33, %17 : f32
    %35 = arith.maximumf %3, %4 : vector<1x256xf32>
    %36 = arith.subf %3, %35 : vector<1x256xf32>
    %37 = math.exp %36 : vector<1x256xf32>
    %38 = arith.subf %4, %35 : vector<1x256xf32>
    %39 = math.exp %38 : vector<1x256xf32>
    %40 = arith.addf %37, %39 : vector<1x256xf32>
    %41 = math.log %40 : vector<1x256xf32>
    %42 = arith.addf %41, %35 : vector<1x256xf32>
    %cst_7 = arith.constant 0.000000e+00 : f32
    %43 = vector.broadcast %cst_7 : f32 to vector<1x256xf32>
    %44 = arith.cmpf oeq, %5, %43 : vector<1x256xf32>
    %45 = arith.select %44, %3, %4 : vector<1x256xi1>, vector<1x256xf32>
    %46 = arith.subf %42, %45 : vector<1x256xf32>
    %47 = arith.mulf %46, %9 : vector<1x256xf32>
    %48 = vector.shape_cast %47 : vector<1x256xf32> to vector<1x1x256xf32>
    %cst_8 = arith.constant dense<0.000000e+00> : vector<1xf32>
    %49 = vector.multi_reduction <add>, %48, %cst_8 [1, 2] : vector<1x1x256xf32> to vector<1xf32>
    %50 = vector.shape_cast %49 : vector<1xf32> to vector<1x1x1xf32>
    %51 = vector.extract %50[0, 0, 0] : f32 from vector<1x1x1xf32>
    %52 = arith.divf %51, %17 : f32
    %c0_9 = arith.constant 0 : index
    %c0_10 = arith.constant 0 : index
    %53 = vector.load %arg1[%c0_9, %c0_10] : memref<32x73xf32, #tpu.memory_space<vmem>>, vector<32x73xf32>
    %54 = vector.extract_strided_slice %53 {offsets = [0, 0], sizes = [32, 32], strides = [1, 1]} : vector<32x73xf32> to vector<32x32xf32>
    %55 = vector.extract_strided_slice %53 {offsets = [0, 32], sizes = [32, 32], strides = [1, 1]} : vector<32x73xf32> to vector<32x32xf32>
    %56 = vector.extract_strided_slice %53 {offsets = [0, 64], sizes = [32, 8], strides = [1, 1]} : vector<32x73xf32> to vector<32x8xf32>
    %57 = vector.extract_strided_slice %53 {offsets = [0, 72], sizes = [32, 1], strides = [1, 1]} : vector<32x73xf32> to vector<32x1xf32>
    %58 = tpu.iota {dimensions = array<i32: 1>} : vector<32x32xi32>
    %c2_i32 = arith.constant 2 : i32
    %59 = vector.broadcast %c2_i32 : i32 to vector<32x32xi32>
    %60 = arith.shrsi %58, %59 : vector<32x32xi32>
    %61 = arith.sitofp %60 : vector<32x32xi32> to vector<32x32xf32>
    %62 = vector.broadcast %57 : vector<32x1xf32> to vector<32x32xf32>
    %63 = arith.cmpf oeq, %61, %62 : vector<32x32xf32>
    %cst_11 = arith.constant 0.000000e+00 : f32
    %64 = vector.broadcast %cst_11 : f32 to vector<32x1xf32>
    %65 = arith.cmpf ogt, %57, %64 : vector<32x1xf32>
    %66 = vector.broadcast %65 : vector<32x1xi1> to vector<32x32xi1>
    %67 = arith.andi %63, %66 : vector<32x32xi1>
    %68 = arith.extui %67 : vector<32x32xi1> to vector<32x32xi32>
    %69 = arith.sitofp %68 : vector<32x32xi32> to vector<32x32xf32>
    %70 = arith.subf %54, %55 : vector<32x32xf32>
    %71 = arith.mulf %69, %70 : vector<32x32xf32>
    %cst_12 = arith.constant 0.000000e+00 : f32
    %72 = vector.broadcast %cst_12 : f32 to vector<32x1xf32>
    %73 = arith.cmpf oge, %57, %72 : vector<32x1xf32>
    %74 = arith.extui %73 : vector<32x1xi1> to vector<32x1xi32>
    %75 = arith.sitofp %74 : vector<32x1xi32> to vector<32x1xf32>
    %76 = vector.shape_cast %75 : vector<32x1xf32> to vector<1x32x1xf32>
    %cst_13 = arith.constant dense<0.000000e+00> : vector<1xf32>
    %77 = vector.multi_reduction <add>, %76, %cst_13 [1, 2] : vector<1x32x1xf32> to vector<1xf32>
    %78 = vector.shape_cast %77 : vector<1xf32> to vector<1x1x1xf32>
    %79 = vector.extract %78[0, 0, 0] : f32 from vector<1x1x1xf32>
    %80 = math.absf %71 : vector<32x32xf32>
    %cst_14 = arith.constant 1.000000e+00 : f32
    %81 = vector.broadcast %cst_14 : f32 to vector<32x32xf32>
    %82 = arith.cmpf olt, %80, %81 : vector<32x32xf32>
    %cst_15 = arith.constant 5.000000e-01 : f32
    %83 = vector.broadcast %cst_15 : f32 to vector<32x32xf32>
    %84 = arith.mulf %83, %71 : vector<32x32xf32>
    %85 = arith.mulf %84, %71 : vector<32x32xf32>
    %cst_16 = arith.constant 5.000000e-01 : f32
    %86 = vector.broadcast %cst_16 : f32 to vector<32x32xf32>
    %87 = arith.subf %80, %86 : vector<32x32xf32>
    %88 = arith.select %82, %85, %87 : vector<32x32xi1>, vector<32x32xf32>
    %89 = vector.shape_cast %88 : vector<32x32xf32> to vector<1x32x32xf32>
    %cst_17 = arith.constant dense<0.000000e+00> : vector<1xf32>
    %90 = vector.multi_reduction <add>, %89, %cst_17 [1, 2] : vector<1x32x32xf32> to vector<1xf32>
    %91 = vector.shape_cast %90 : vector<1xf32> to vector<1x1x1xf32>
    %92 = vector.extract %91[0, 0, 0] : f32 from vector<1x1x1xf32>
    %93 = arith.divf %92, %79 : f32
    %cst_18 = arith.constant dense<0xFF800000> : vector<32xf32>
    %94 = vector.multi_reduction <maximumf>, %56, %cst_18 [1] : vector<32x8xf32> to vector<32xf32>
    %95 = vector.shape_cast %94 : vector<32xf32> to vector<32x1xf32>
    %96 = vector.broadcast %95 : vector<32x1xf32> to vector<32x8xf32>
    %97 = arith.subf %56, %96 : vector<32x8xf32>
    %98 = math.exp %97 : vector<32x8xf32>
    %cst_19 = arith.constant dense<0.000000e+00> : vector<32xf32>
    %99 = vector.multi_reduction <add>, %98, %cst_19 [1] : vector<32x8xf32> to vector<32xf32>
    %100 = vector.shape_cast %99 : vector<32xf32> to vector<32x1xf32>
    %101 = math.log %100 : vector<32x1xf32>
    %102 = arith.addf %101, %95 : vector<32x1xf32>
    %103 = tpu.iota {dimensions = array<i32: 1>} : vector<32x8xi32>
    %104 = arith.sitofp %103 : vector<32x8xi32> to vector<32x8xf32>
    %105 = vector.broadcast %57 : vector<32x1xf32> to vector<32x8xf32>
    %106 = arith.cmpf oeq, %104, %105 : vector<32x8xf32>
    %107 = arith.extui %106 : vector<32x8xi1> to vector<32x8xi32>
    %108 = arith.sitofp %107 : vector<32x8xi32> to vector<32x8xf32>
    %109 = arith.mulf %108, %56 : vector<32x8xf32>
    %cst_20 = arith.constant dense<0.000000e+00> : vector<32xf32>
    %110 = vector.multi_reduction <add>, %109, %cst_20 [1] : vector<32x8xf32> to vector<32xf32>
    %111 = vector.shape_cast %110 : vector<32xf32> to vector<32x1xf32>
    %112 = arith.subf %102, %111 : vector<32x1xf32>
    %113 = vector.shape_cast %112 : vector<32x1xf32> to vector<1x32x1xf32>
    %cst_21 = arith.constant dense<0.000000e+00> : vector<1xf32>
    %114 = vector.multi_reduction <add>, %113, %cst_21 [1, 2] : vector<1x32x1xf32> to vector<1xf32>
    %115 = vector.shape_cast %114 : vector<1xf32> to vector<1x1x1xf32>
    %116 = vector.extract %115[0, 0, 0] : f32 from vector<1x1x1xf32>
    %cst_22 = arith.constant 3.200000e+01 : f32
    %117 = arith.divf %116, %cst_22 : f32
    %c0_23 = arith.constant 0 : index
    %118 = memref.load %arg2[%c0_23] : memref<5xf32, #tpu.memory_space<smem>>
    memref.store %34, %arg2[%c0_23] : memref<5xf32, #tpu.memory_space<smem>>
    %c1 = arith.constant 1 : index
    %119 = memref.load %arg2[%c1] : memref<5xf32, #tpu.memory_space<smem>>
    memref.store %52, %arg2[%c1] : memref<5xf32, #tpu.memory_space<smem>>
    %c2 = arith.constant 2 : index
    %120 = memref.load %arg2[%c2] : memref<5xf32, #tpu.memory_space<smem>>
    memref.store %93, %arg2[%c2] : memref<5xf32, #tpu.memory_space<smem>>
    %c3 = arith.constant 3 : index
    %121 = memref.load %arg2[%c3] : memref<5xf32, #tpu.memory_space<smem>>
    memref.store %117, %arg2[%c3] : memref<5xf32, #tpu.memory_space<smem>>
    %122 = arith.addf %34, %52 : f32
    %123 = arith.addf %122, %93 : f32
    %124 = arith.addf %123, %117 : f32
    %c4 = arith.constant 4 : index
    %125 = memref.load %arg2[%c4] : memref<5xf32, #tpu.memory_space<smem>>
    memref.store %124, %arg2[%c4] : memref<5xf32, #tpu.memory_space<smem>>
    return
  }
}

</mosaic_0001>

<llo_original>
// kernel: tpu_custom_call.1
$region0: #{tpu_custom_call.1}
  #allocation0 [shape = 'u32[]', space=smem, size = 0x4, offset = 0x4, fixed_abs, tag = 'smem constant byte address 0x4 - core index']
  #allocation1 [shape = 'u32[144,128]{1,0:T(1,128)}', space=vmem, size = 0x12000, scoped, tag = 'internal scratch']
  %s0 = inlined_call_operand.hbm [shape: f32[11,256], index: 0, kind: input, shape index: {}]
  %s1 = inlined_call_operand.hbm [shape: f32[32,73], index: 1, kind: input, shape index: {}]
  %s2 = inlined_call_operand.hbm [shape: f32[5], index: 2, kind: output, shape index: {}]
  %s3 = sld [smem:[#allocation0]]
  $region26: #{tpu_custom_call.1} parent=0
    _
  %s5 = ssub.s32 1, %s3
  %s6 = scalar_select 0, %s5, %s3
  $region1: #{tpu_custom_call.1} parent=0
    #allocation2 [shape = 'u8[16384]{0}', space=vmem, size = 0x4000, scoped, tag = 'input window, operand 0, single buffered']
    #allocation3 [shape = 's32[1]{0}', space=sflag, size = 0x4, scoped, tag = 'scoped memory for tpu_custom_call.1']
    #allocation4 [shape = 's32[1]{0}', space=sflag, size = 0x4, scoped, tag = 'scoped memory for tpu_custom_call.1']
    #allocation5 [shape = 'u8[16384]{0}', space=vmem, size = 0x4000, scoped, tag = 'input window, operand 1, single buffered']
    #allocation6 [shape = 's32[1]{0}', space=sflag, size = 0x4, scoped, tag = 'scoped memory for tpu_custom_call.1']
    #allocation7 [shape = 'u8[512]{0}', space=smem, size = 0x200, scoped, tag = 'output window, operand 0, single buffered']
    %7 = vsyncpa [#allocation3], 0
    %8 = vsyncpa [#allocation6], 0
    %9 = vsyncpa [#allocation4], 0
    // Predicated region
    $region2: #{tpu_custom_call.1} parent=1 // pred_check
      _
    $region3: #{tpu_custom_call.1} parent=1 // pred_check_branch
      %11 = sbr.rel (0) target = $region5
    $region4: #{tpu_custom_call.1} parent=1 // pred_region
      %s13 = ssub.s32 512, 512
      %14 = vsyncadd [#allocation3], %s13
      %s15 = sshll.u32 [#allocation2], 4
      %s16 = int_to_ptr.vmem [resolvable:$true] %s15
      %21 = dma.hbm_to_vmem [thread:$0]  %s0, 512, %s16, [#allocation3], 256, 256, 16
    $region5: #{tpu_custom_call.1} parent=1 // pred_fallthru
      _
    // Predicated region
    $region6: #{tpu_custom_call.1} parent=1 // pred_check
      _
    $region7: #{tpu_custom_call.1} parent=1 // pred_check_branch
      %23 = sbr.rel (0) target = $region9
    $region8: #{tpu_custom_call.1} parent=1 // pred_region
      %s25 = ssub.s32 512, 512
      %26 = vsyncadd [#allocation6], %s25
      %s27 = sshll.u32 [#allocation5], 4
      %s28 = int_to_ptr.vmem [resolvable:$true] %s27
      %33 = dma.hbm_to_vmem [thread:$0]  %s1, 512, %s28, [#allocation6], 128, 128, 8
    $region9: #{tpu_custom_call.1} parent=1 // pred_fallthru
      _
    // Predicated region
    $region10: #{tpu_custom_call.1} parent=1 // pred_check
      _
    $region11: #{tpu_custom_call.1} parent=1 // pred_check_branch
      %35 = sbr.rel (0) target = $region13
    $region12: #{tpu_custom_call.1} parent=1 // pred_region
      %36 = dma.done [#allocation3], 512
    $region13: #{tpu_custom_call.1} parent=1 // pred_fallthru
      _
    // Predicated region
    $region14: #{tpu_custom_call.1} parent=1 // pred_check
      _
    $region15: #{tpu_custom_call.1} parent=1 // pred_check_branch
      %38 = sbr.rel (0) target = $region17
    $region16: #{tpu_custom_call.1} parent=1 // pred_region
      %39 = dma.done [#allocation6], 512
    $region17: #{tpu_custom_call.1} parent=1 // pred_fallthru
      _
    %v40 = vld [vmem:[#allocation2] sm:$0xff]
    %v41 = vld [vmem:[#allocation2 + $0x8] sm:$0xff]
    %v42 = vld [vmem:[#allocation2 + $0x10] sm:$0x7]
    %v43 = vld [vmem:[#allocation2 + $0x18] sm:$0x7]
    %vm44 = vcmp.ge.f32.partialorder %v42, 0.0
    %vm45 = vcmp.ge.f32.partialorder %v43, 0.0
    %v46 = vsel %vm44, 1, 0
    %v47 = vsel %vm45, 1, 0
    %v48 = vcvt.s32.f32 %v46
    %v49 = vcvt.s32.f32 %v47
    %vm50 = vcmp.gt.f32.partialorder %v42, 0.0
    %vm51 = vcmp.gt.f32.partialorder %v43, 0.0
    %v52 = vsel %vm50, 1, 0
    %v53 = vsel %vm51, 1, 0
    %v54 = vcvt.s32.f32 %v52
    %v55 = vcvt.s32.f32 %v53
    %v58 = vrot.slane %v48, 2
    %v59 = vrot.slane %v49, 2
    %vm62 = vcmask 1040384
    %v63 = vsel %vm62, %v58, 0.0
    %v64 = vsel %vm62, %v59, 0.0
    %v65 = vadd.f32 %v63, %v64
    %66 = vadd.xlane.f32.xlu0 %v65
    %v67 = vpop.xlane.xlu0 %66
    %v68 = vrot.slane %v67, 4
    %v69 = vadd.f32 %v67, %v68
    %v70 = vrot.slane %v69, 2
    %v71 = vadd.f32 %v69, %v70
    %v72 = vrot.slane %v71, 1
    %v73 = vadd.f32 %v71, %v72
    %s74 = vtos %v73
    %v77 = vrot.slane %v40, 4
    %v78 = vrot.slane %v41, 4
    %v81 = vsub.f32 %v40, %v77
    %v82 = vsub.f32 %v41, %v78
    %v83 = vlaneseq
    %v84 = vshrl.u32 %v83, 7
    %v85 = vsub.s32 2, %v84
    %v86 = vrot.slane %v54, %v85
    %v87 = vlaneseq
    %v88 = vshrl.u32 %v87, 7
    %v89 = vsub.s32 2, %v88
    %v90 = vrot.slane %v55, %v89
    %v91 = vmul.f32 %v86, %v81
    %v92 = vmul.f32 %v90, %v82
    %v93 = vand.u32 2147483647, %v91
    %v94 = vand.u32 2147483647, %v92
    %vm95 = vcmp.lt.f32.partialorder %v93, 0.11111111
    %vm96 = vcmp.lt.f32.partialorder %v94, 0.11111111
    %v97 = vmul.f32 %v91, 4.5
    %v98 = vmul.f32 %v92, 4.5
    %v99 = vmul.f32 %v97, %v91
    %v100 = vmul.f32 %v98, %v92
    %v101 = vsub.f32 %v93, 0.055555556
    %v102 = vsub.f32 %v94, 0.055555556
    %v103 = vsel %vm95, %v99, %v101
    %v104 = vsel %vm96, %v100, %v102
    %v107 = vrot.slane %v103, 4
    %v108 = vrot.slane %v104, 4
    %vm111 = vcmask 1043456
    %v112 = vsel %vm111, %v107, 0.0
    %v113 = vsel %vm111, %v108, 0.0
    %v114 = vadd.f32 %v112, %v113
    %115 = vadd.xlane.f32.xlu0 %v114
    %v116 = vpop.xlane.xlu0 %115
    %v117 = vrot.slane %v116, 4
    %v118 = vadd.f32 %v116, %v117
    %v119 = vrot.slane %v118, 2
    %v120 = vadd.f32 %v118, %v119
    %v121 = vrot.slane %v120, 1
    %v122 = vadd.f32 %v120, %v121
    %s123 = vtos %v122
    %v124 = vstv %s74
    %v125 = vrcp.pop %v124
    %s126 = vtos %v125
    %s127 = smul.f32 %s123, %s126
    %v130 = vrot.slane %v42, 1
    %v131 = vrot.slane %v43, 1
    %v134 = vmax.f32 %v42, %v130
    %v135 = vmax.f32 %v43, %v131
    %v136 = vsub.f32 %v42, %v134
    %v137 = vsub.f32 %v43, %v135
    %v138 = vmul.f32 %v136, 1.442695
    %v139 = vpow.pop %v138
    %v140 = vmul.f32 %v137, 1.442695
    %v141 = vpow.pop %v140
    %v144 = vrot.slane %v134, 7
    %v145 = vrot.slane %v135, 7
    %v148 = vsub.f32 %v42, %v144
    %v149 = vsub.f32 %v43, %v145
    %v150 = vmul.f32 %v148, 1.442695
    %v151 = vpow.pop %v150
    %v152 = vmul.f32 %v149, 1.442695
    %v153 = vpow.pop %v152
    %v156 = vrot.slane %v151, 1
    %v157 = vrot.slane %v153, 1
    %v160 = vadd.f32 %v139, %v156
    %v161 = vadd.f32 %v141, %v157
    %v162 = vlog2.pop %v160
    %v163 = vmul.f32 %v162, 0.6931472
    %v164 = vlog2.pop %v161
    %v165 = vmul.f32 %v164, 0.6931472
    %v166 = vadd.f32 %v163, %v134
    %v167 = vadd.f32 %v165, %v135
    %vm168 = vcmp.eq.f32.partialorder %v42, 0.0
    %vm169 = vcmp.eq.f32.partialorder %v43, 0.0
    %v170 = vrot.slane %v42, 6
    %v171 = vrot.slane %v43, 6
    %v174 = vrot.slane %v42, 7
    %v175 = vrot.slane %v43, 7
    %v178 = vsel %vm168, %v170, %v174
    %v179 = vsel %vm169, %v171, %v175
    %v182 = vrot.slane %v178, 2
    %v183 = vrot.slane %v179, 2
    %v186 = vsub.f32 %v166, %v182
    %v187 = vsub.f32 %v167, %v183
    %v188 = vmul.f32 %v186, %v58
    %v189 = vmul.f32 %v187, %v59
    %v190 = vsel %vm62, %v188, 0.0
    %v191 = vsel %vm62, %v189, 0.0
    %v192 = vadd.f32 %v190, %v191
    %193 = vadd.xlane.f32.xlu0 %v192
    %v194 = vpop.xlane.xlu0 %193
    %v195 = vrot.slane %v194, 4
    %v196 = vadd.f32 %v194, %v195
    %v197 = vrot.slane %v196, 2
    %v198 = vadd.f32 %v196, %v197
    %v199 = vrot.slane %v198, 1
    %v200 = vadd.f32 %v198, %v199
    %s201 = vtos %v200
    %v202 = vstv %s74
    %v203 = vrcp.pop %v202
    %s204 = vtos %v203
    %s205 = smul.f32 %s201, %s204
    %v206 = vld [vmem:[#allocation5] sm:$0xff]
    %v207 = vld [vmem:[#allocation5 + $0x8] sm:$0xff]
    %v208 = vld [vmem:[#allocation5 + $0x10] sm:$0xff]
    %v209 = vld [vmem:[#allocation5 + $0x18] sm:$0xff]
    %v210 = vlaneseq
    %v211 = vand.u32 %v210, 127
    %v212 = vshra.s32 %v211, 2
    %v213 = vcvt.s32.f32 %v212
    %215 = vset.pattern.permute.xlu0 72
    %216 = vperm.xlu0 %215, %v206
    %v217 = vpop.permute.xlu0 %216
    %220 = vset.pattern.permute.xlu0 72
    %221 = vperm.xlu0 %220, %v207
    %v222 = vpop.permute.xlu0 %221
    %225 = vset.pattern.permute.xlu0 72
    %226 = vperm.xlu0 %225, %v208
    %v227 = vpop.permute.xlu0 %226
    %230 = vset.pattern.permute.xlu0 72
    %231 = vperm.xlu0 %230, %v209
    %v232 = vpop.permute.xlu0 %231
    %vm234 = vcmp.eq.f32.partialorder %v213, %v217
    %vm235 = vcmp.eq.f32.partialorder %v213, %v222
    %vm236 = vcmp.eq.f32.partialorder %v213, %v227
    %vm237 = vcmp.eq.f32.partialorder %v213, %v232
    %vm238 = vcmp.gt.f32.partialorder %v206, 0.0
    %vm239 = vcmp.gt.f32.partialorder %v207, 0.0
    %vm240 = vcmp.gt.f32.partialorder %v208, 0.0
    %vm241 = vcmp.gt.f32.partialorder %v209, 0.0
    %v242 = vsel %vm238, 1, 0
    %v243 = vsel %vm239, 1, 0
    %v244 = vsel %vm240, 1, 0
    %v245 = vsel %vm241, 1, 0
    %246 = vset.pattern.permute.xlu0 72
    %247 = vperm.xlu0 %246, %v242
    %v248 = vpop.permute.xlu0 %247
    %249 = vset.pattern.permute.xlu0 72
    %250 = vperm.xlu0 %249, %v243
    %v251 = vpop.permute.xlu0 %250
    %252 = vset.pattern.permute.xlu0 72
    %253 = vperm.xlu0 %252, %v244
    %v254 = vpop.permute.xlu0 %253
    %255 = vset.pattern.permute.xlu0 72
    %256 = vperm.xlu0 %255, %v245
    %v257 = vpop.permute.xlu0 %256
    %vm258 = vcmp.eq.s32.totalorder %v248, 1
    %vm259 = vcmp.eq.s32.totalorder %v251, 1
    %vm260 = vcmp.eq.s32.totalorder %v254, 1
    %vm261 = vcmp.eq.s32.totalorder %v257, 1
    %vm262 = vmand %vm234, %vm258
    %vm263 = vmand %vm235, %vm259
    %vm264 = vmand %vm236, %vm260
    %vm265 = vmand %vm237, %vm261
    %v266 = vsel %vm262, 1, 0
    %v267 = vsel %vm263, 1, 0
    %v268 = vsel %vm264, 1, 0
    %v269 = vsel %vm265, 1, 0
    %v270 = vcvt.s32.f32 %v266
    %v271 = vcvt.s32.f32 %v267
    %v272 = vcvt.s32.f32 %v268
    %v273 = vcvt.s32.f32 %v269
    %274 = vrot.lane.b32.xlu0 %v206, 96
    %v275 = vpop.permute.xlu0 %274
    %276 = vrot.lane.b32.xlu0 %v207, 96
    %v277 = vpop.permute.xlu0 %276
    %278 = vrot.lane.b32.xlu0 %v208, 96
    %v279 = vpop.permute.xlu0 %278
    %280 = vrot.lane.b32.xlu0 %v209, 96
    %v281 = vpop.permute.xlu0 %280
    %v286 = vsub.f32 %v206, %v275
    %v287 = vsub.f32 %v207, %v277
    %v288 = vsub.f32 %v208, %v279
    %v289 = vsub.f32 %v209, %v281
    %v290 = vmul.f32 %v270, %v286
    %v291 = vmul.f32 %v271, %v287
    %v292 = vmul.f32 %v272, %v288
    %v293 = vmul.f32 %v273, %v289
    %vm294 = vcmp.ge.f32.partialorder %v206, 0.0
    %vm295 = vcmp.ge.f32.partialorder %v207, 0.0
    %vm296 = vcmp.ge.f32.partialorder %v208, 0.0
    %vm297 = vcmp.ge.f32.partialorder %v209, 0.0
    %v298 = vsel %vm294, 1, 0
    %v299 = vsel %vm295, 1, 0
    %v300 = vsel %vm296, 1, 0
    %v301 = vsel %vm297, 1, 0
    %v302 = vcvt.s32.f32 %v298
    %v303 = vcvt.s32.f32 %v299
    %v304 = vcvt.s32.f32 %v300
    %v305 = vcvt.s32.f32 %v301
    %310 = vrot.lane.b32.xlu0 %v302, 56
    %v311 = vpop.permute.xlu0 %310
    %312 = vrot.lane.b32.xlu0 %v303, 56
    %v313 = vpop.permute.xlu0 %312
    %314 = vrot.lane.b32.xlu0 %v304, 56
    %v315 = vpop.permute.xlu0 %314
    %316 = vrot.lane.b32.xlu0 %v305, 56
    %v317 = vpop.permute.xlu0 %316
    %vm322 = vcmask 7168
    %v323 = vsel %vm322, %v311, 0.0
    %v324 = vsel %vm322, %v313, 0.0
    %v325 = vadd.f32 %v323, %v324
    %v326 = vsel %vm322, %v315, 0.0
    %v327 = vadd.f32 %v325, %v326
    %v328 = vsel %vm322, %v317, 0.0
    %v329 = vadd.f32 %v327, %v328
    %330 = vadd.xlane.f32.xlu0 %v329
    %v331 = vpop.xlane.xlu0 %330
    %v332 = vrot.slane %v331, 4
    %v333 = vadd.f32 %v331, %v332
    %v334 = vrot.slane %v333, 2
    %v335 = vadd.f32 %v333, %v334
    %v336 = vrot.slane %v335, 1
    %v337 = vadd.f32 %v335, %v336
    %s338 = vtos %v337
    %v339 = vand.u32 2147483647, %v290
    %v340 = vand.u32 2147483647, %v291
    %v341 = vand.u32 2147483647, %v292
    %v342 = vand.u32 2147483647, %v293
    %vm343 = vcmp.lt.f32.partialorder %v339, 1.0
    %vm344 = vcmp.lt.f32.partialorder %v340, 1.0
    %vm345 = vcmp.lt.f32.partialorder %v341, 1.0
    %vm346 = vcmp.lt.f32.partialorder %v342, 1.0
    %v347 = vmul.f32 %v290, 0.5
    %v348 = vmul.f32 %v291, 0.5
    %v349 = vmul.f32 %v292, 0.5
    %v350 = vmul.f32 %v293, 0.5
    %v351 = vmul.f32 %v347, %v290
    %v352 = vmul.f32 %v348, %v291
    %v353 = vmul.f32 %v349, %v292
    %v354 = vmul.f32 %v350, %v293
    %v355 = vsub.f32 %v339, 0.5
    %v356 = vsub.f32 %v340, 0.5
    %v357 = vsub.f32 %v341, 0.5
    %v358 = vsub.f32 %v342, 0.5
    %v359 = vsel %vm343, %v351, %v355
    %v360 = vsel %vm344, %v352, %v356
    %v361 = vsel %vm345, %v353, %v357
    %v362 = vsel %vm346, %v354, %v358
    %vm363 = vcmask 261120
    %v364 = vsel %vm363, %v359, 0.0
    %v365 = vsel %vm363, %v360, 0.0
    %v366 = vadd.f32 %v364, %v365
    %v367 = vsel %vm363, %v361, 0.0
    %v368 = vadd.f32 %v366, %v367
    %v369 = vsel %vm363, %v362, 0.0
    %v370 = vadd.f32 %v368, %v369
    %371 = vadd.xlane.f32.xlu0 %v370
    %v372 = vpop.xlane.xlu0 %371
    %v373 = vrot.slane %v372, 4
    %v374 = vadd.f32 %v372, %v373
    %v375 = vrot.slane %v374, 2
    %v376 = vadd.f32 %v374, %v375
    %v377 = vrot.slane %v376, 1
    %v378 = vadd.f32 %v376, %v377
    %s379 = vtos %v378
    %v380 = vstv %s338
    %v381 = vrcp.pop %v380
    %s382 = vtos %v381
    %s383 = smul.f32 %s379, %s382
    %vm384 = vcmask 589312
    %v385 = vsel %vm384, %v206, -inf
    %386 = vmax.xlane.f32.xlu0 %v385
    %v387 = vpop.xlane.xlu0 %386
    %v388 = vsel %vm384, %v207, -inf
    %389 = vmax.xlane.f32.xlu0 %v388
    %v390 = vpop.xlane.xlu0 %389
    %v391 = vsel %vm384, %v208, -inf
    %392 = vmax.xlane.f32.xlu0 %v391
    %v393 = vpop.xlane.xlu0 %392
    %v394 = vsel %vm384, %v209, -inf
    %395 = vmax.xlane.f32.xlu0 %v394
    %v396 = vpop.xlane.xlu0 %395
    %v397 = vsub.f32 %v206, %v387
    %v398 = vsub.f32 %v207, %v390
    %v399 = vsub.f32 %v208, %v393
    %v400 = vsub.f32 %v209, %v396
    %v401 = vmul.f32 %v397, 1.442695
    %v402 = vpow.pop %v401
    %v403 = vmul.f32 %v398, 1.442695
    %v404 = vpow.pop %v403
    %v405 = vmul.f32 %v399, 1.442695
    %v406 = vpow.pop %v405
    %v407 = vmul.f32 %v400, 1.442695
    %v408 = vpow.pop %v407
    %413 = vrot.lane.b32.xlu0 %v402, 64
    %v414 = vpop.permute.xlu0 %413
    %415 = vrot.lane.b32.xlu0 %v404, 64
    %v416 = vpop.permute.xlu0 %415
    %417 = vrot.lane.b32.xlu0 %v406, 64
    %v418 = vpop.permute.xlu0 %417
    %419 = vrot.lane.b32.xlu0 %v408, 64
    %v420 = vpop.permute.xlu0 %419
    %vm425 = vcmask 64512
    %v426 = vsel %vm425, %v414, 0.0
    %427 = vadd.xlane.f32.xlu0 %v426
    %v428 = vpop.xlane.xlu0 %427
    %v429 = vsel %vm425, %v416, 0.0
    %430 = vadd.xlane.f32.xlu0 %v429
    %v431 = vpop.xlane.xlu0 %430
    %v432 = vsel %vm425, %v418, 0.0
    %433 = vadd.xlane.f32.xlu0 %v432
    %v434 = vpop.xlane.xlu0 %433
    %v435 = vsel %vm425, %v420, 0.0
    %436 = vadd.xlane.f32.xlu0 %v435
    %v437 = vpop.xlane.xlu0 %436
    %v438 = vlog2.pop %v428
    %v439 = vmul.f32 %v438, 0.6931472
    %v440 = vlog2.pop %v431
    %v441 = vmul.f32 %v440, 0.6931472
    %v442 = vlog2.pop %v434
    %v443 = vmul.f32 %v442, 0.6931472
    %v444 = vlog2.pop %v437
    %v445 = vmul.f32 %v444, 0.6931472
    %v446 = vadd.f32 %v439, %v387
    %v447 = vadd.f32 %v441, %v390
    %v448 = vadd.f32 %v443, %v393
    %v449 = vadd.f32 %v445, %v396
    %v450 = vcvt.s32.f32 %v211
    %vm451 = vcmp.eq.f32.partialorder %v450, %v217
    %vm452 = vcmp.eq.f32.partialorder %v450, %v222
    %vm453 = vcmp.eq.f32.partialorder %v450, %v227
    %vm454 = vcmp.eq.f32.partialorder %v450, %v232
    %v455 = vsel %vm451, 1, 0
    %v456 = vsel %vm452, 1, 0
    %v457 = vsel %vm453, 1, 0
    %v458 = vsel %vm454, 1, 0
    %v459 = vcvt.s32.f32 %v455
    %v460 = vcvt.s32.f32 %v456
    %v461 = vcvt.s32.f32 %v457
    %v462 = vcvt.s32.f32 %v458
    %463 = vrot.lane.b32.xlu0 %v206, 64
    %v464 = vpop.permute.xlu0 %463
    %465 = vrot.lane.b32.xlu0 %v207, 64
    %v466 = vpop.permute.xlu0 %465
    %467 = vrot.lane.b32.xlu0 %v208, 64
    %v468 = vpop.permute.xlu0 %467
    %469 = vrot.lane.b32.xlu0 %v209, 64
    %v470 = vpop.permute.xlu0 %469
    %v475 = vmul.f32 %v459, %v464
    %v476 = vmul.f32 %v460, %v466
    %v477 = vmul.f32 %v461, %v468
    %v478 = vmul.f32 %v462, %v470
    %v479 = vsel %vm425, %v475, 0.0
    %480 = vadd.xlane.f32.xlu0 %v479
    %v481 = vpop.xlane.xlu0 %480
    %v482 = vsel %vm425, %v476, 0.0
    %483 = vadd.xlane.f32.xlu0 %v482
    %v484 = vpop.xlane.xlu0 %483
    %v485 = vsel %vm425, %v477, 0.0
    %486 = vadd.xlane.f32.xlu0 %v485
    %v487 = vpop.xlane.xlu0 %486
    %v488 = vsel %vm425, %v478, 0.0
    %489 = vadd.xlane.f32.xlu0 %v488
    %v490 = vpop.xlane.xlu0 %489
    %v491 = vsub.f32 %v446, %v481
    %v492 = vsub.f32 %v447, %v484
    %v493 = vsub.f32 %v448, %v487
    %v494 = vsub.f32 %v449, %v490
    %v495 = vsel %vm322, %v491, 0.0
    %v496 = vsel %vm322, %v492, 0.0
    %v497 = vadd.f32 %v495, %v496
    %v498 = vsel %vm322, %v493, 0.0
    %v499 = vadd.f32 %v497, %v498
    %v500 = vsel %vm322, %v494, 0.0
    %v501 = vadd.f32 %v499, %v500
    %502 = vadd.xlane.f32.xlu0 %v501
    %v503 = vpop.xlane.xlu0 %502
    %v504 = vrot.slane %v503, 4
    %v505 = vadd.f32 %v503, %v504
    %v506 = vrot.slane %v505, 2
    %v507 = vadd.f32 %v505, %v506
    %v508 = vrot.slane %v507, 1
    %v509 = vadd.f32 %v507, %v508
    %s510 = vtos %v509
    %v511 = vrcp.pop 32.0
    %s512 = vtos %v511
    %s513 = smul.f32 %s510, %s512
    %s514 = scalar_lea.smem [#allocation7], 0
    %515 = sst [smem:[%s514]] %s127
    %s516 = scalar_lea.smem [#allocation7], 1
    %517 = sst [smem:[%s516]] %s205
    %s518 = scalar_lea.smem [#allocation7], 2
    %519 = sst [smem:[%s518]] %s383
    %s520 = scalar_lea.smem [#allocation7], 3
    %521 = sst [smem:[%s520]] %s513
    %s522 = sadd.f32 %s127, %s205
    %s523 = sadd.f32 %s522, %s383
    %s524 = sadd.f32 %s523, %s513
    %s525 = scalar_lea.smem [#allocation7], 4
    %526 = sst [smem:[%s525]] %s524
    // Predicated region
    $region18: #{tpu_custom_call.1} parent=1 // pred_check
      _
    $region19: #{tpu_custom_call.1} parent=1 // pred_check_branch
      %528 = sbr.rel (0) target = $region21
    $region20: #{tpu_custom_call.1} parent=1 // pred_region
      %s530 = ssub.s32 16, 16
      %531 = vsyncadd [#allocation4], %s530
      %534 = dma.smem_to_hbm [#allocation7], 16, %s2, [#allocation4]
    $region21: #{tpu_custom_call.1} parent=1 // pred_fallthru
      _
    // Predicated region
    $region22: #{tpu_custom_call.1} parent=1 // pred_check
      _
    $region23: #{tpu_custom_call.1} parent=1 // pred_check_branch
      %536 = sbr.rel (0) target = $region25
    $region24: #{tpu_custom_call.1} parent=1 // pred_region
      %537 = dma.done [#allocation4], 16
    $region25: #{tpu_custom_call.1} parent=1 // pred_fallthru
      _
    %538 = sfence
    %539 = vsyncpa [#allocation3], 1
    %540 = vsyncpa [#allocation6], 1
    %541 = vsyncpa [#allocation4], 1

</llo_original>
